<compile_context>
chip_gen: v5e
topology: v5e:2x2
jax: 0.10.0
libtpu: 0.0.40
codegen_flags: <defaults>
</compile_context>

<pallas_src>
import math

import jax
import jax.numpy as jnp
from jax.experimental import pallas as pl
from jax.experimental.pallas import tpu as pltpu


def _round_up(x: int, m: int) -> int:
    return ((x + m - 1) // m) * m


def _make_kernel(ns: int, lq: int):
    def kernel(xq_ref, w_ref, b_ref, attn_w_ref, attn_b_ref, gate_ref):
        # xq_ref:     (TB, Lq*E)      lane-dense question tile
        # w_ref:      (Lq*E, Lq*Ns)   fused block-diagonal score weight (VMEM)
        # b_ref:      (1, Lq*Ns)      fused score bias (VMEM)
        # attn_w_ref: (Lq,)           attn Linear weight (SMEM scalars)
        # attn_b_ref: (1,)            attn Linear bias   (SMEM scalar)
        # gate_ref:   (TB, Ns)
        # Single MXU push, K = Lq*E (=128): s2[b, l*Ns + n] = score[b, l, n].
        s2 = jnp.dot(xq_ref[...], w_ref[...],
                     preferred_element_type=jnp.float32) + b_ref[...]   # (TB, Lq*Ns)

        # Softmax over l fused with the attn(Lq -> 1) reduction.  Columns are
        # l-major groups of Ns lanes; reductions over l are a short static loop
        # over lane slices (no (TB, Lq, Ns) tensor is materialized).
        m = s2[:, 0:ns]
        for l in range(1, lq):
            m = jnp.maximum(m, s2[:, l * ns:(l + 1) * ns])              # (TB, Ns)

        denom = jnp.zeros_like(m)
        wsum = jnp.zeros_like(m)
        for l in range(lq):
            e = jnp.exp(s2[:, l * ns:(l + 1) * ns] - m)                 # EUP
            denom = denom + e
            wsum = wsum + attn_w_ref[l] * e

        # Normalize AFTER the weighted sum (identical up to reassociation);
        # reciprocal goes to the otherwise-idle EUP slot.
        logits = wsum * pl.reciprocal(denom, approx=True) + attn_b_ref[0]
        gate_ref[...] = jax.nn.sigmoid(logits)                          # (TB, Ns)

    return kernel


def sequential_schema_attention(question, schema, params, *, batch_tile=None):
    """question: (B, Lq, E) f32; schema: (1, Ns, E) f32.  Returns (emb, gate)."""
    B, Lq, E = question.shape
    schema2d = schema[0]                                   # (Ns, E)
    Ns = schema2d.shape[0]
    H = params["wq_w"].shape[1]
    inv_dk = 1.0 / math.sqrt(H)

    # ---- one-time (per call, constant-foldable) weight fusion in the wrapper ----
    # k = wk(schema) is batch-invariant: a tiny (Ns, H) op, done once here.
    k = schema2d @ params["wk_w"] + params["wk_b"]         # (Ns, H)
    # score[b,l,n] = (question[b,l] @ wq_w + wq_b) . k[n] / sqrt(H)
    #             = question[b,l] @ A + c,   with 1/sqrt(H) folded into A, c.
    A = (params["wq_w"] @ k.T) * inv_dk                    # (E, Ns)
    c = (params["wq_b"] @ k.T) * inv_dk                    # (Ns,)
    # Block-diagonal fused weight so the kernel matmul contracts over Lq*E (=128).
    w_score = jnp.kron(jnp.eye(Lq, dtype=A.dtype), A)      # (Lq*E, Lq*Ns)
    b_score = jnp.tile(c, Lq).reshape(1, Lq * Ns)          # (1, Lq*Ns)

    xq_flat = question.reshape(B, Lq * E)                  # lane-dense (B, 128)
    attn_w = params["attn_w"].reshape(Lq)
    attn_b = params["attn_b"].reshape(1)

    # Batch tile: single fat step for small B; for larger B, >= 2 grid steps
    # (uses both v7x TensorCores) with a multiple-of-8 row tile, capped to bound
    # VMEM (v7x: 64 MiB physical / 32 MiB default scoped).
    if batch_tile is not None:
        tb = batch_tile
    elif B <= 8:
        tb = B
    else:
        tb = min(_round_up(pl.cdiv(B, 2), 8), 1024)
    nb = pl.cdiv(B, tb)

    kernel = _make_kernel(Ns, Lq)

    gate = pl.pallas_call(
        kernel,
        out_shape=jax.ShapeDtypeStruct((B, Ns), jnp.float32),
        grid_spec=pltpu.PrefetchScalarGridSpec(
            num_scalar_prefetch=0,
            grid=(nb,),
            in_specs=[
                pl.BlockSpec((tb, Lq * E), lambda b: (b, 0)),        # question tile
                pl.BlockSpec((Lq * E, Lq * Ns), lambda b: (0, 0)),   # fused weight
                pl.BlockSpec((1, Lq * Ns), lambda b: (0, 0)),        # fused bias
                pl.BlockSpec(memory_space=pltpu.MemorySpace.SMEM),   # attn weight
                pl.BlockSpec(memory_space=pltpu.MemorySpace.SMEM),   # attn bias
            ],
            out_specs=pl.BlockSpec((tb, Ns), lambda b: (b, 0)),
        ),
        compiler_params=pltpu.CompilerParams(
            dimension_semantics=("parallel",),
            # Above v5e's 16 MiB default scoped limit; comfortable on v7x.
            vmem_limit_bytes=32 * 1024 * 1024,
        ),
    )(xq_flat, w_score, b_score, attn_w, attn_b)

    # emb is a trivial broadcast; keep it out of the kernel (dense XLA op).
    emb = schema2d[None, :, :] * gate[:, :, None]          # (B, Ns, E)
    return emb, gate


def reference(question, schema, params):
    """Pure-JAX reference mirroring the PyTorch forward."""
    H = params["wq_w"].shape[1]
    d_k = math.sqrt(H)
    q = question @ params["wq_w"] + params["wq_b"]          # (B, Lq, H)
    k = (schema @ params["wk_w"] + params["wk_b"])[0]       # (Ns, H)
    x = jnp.einsum("blh,nh->bln", q, k) / d_k               # (B, Lq, Ns)
    x = jax.nn.softmax(x, axis=1)                           # softmax over Lq
    xp = jnp.transpose(x, (0, 2, 1))                        # (B, Ns, Lq)
    logits = xp @ params["attn_w"].reshape(-1, 1) + params["attn_b"]  # (B, Ns, 1)
    gate = jax.nn.sigmoid(logits[..., 0])                   # (B, Ns)
    emb = schema * gate[..., None]                          # (B, Ns, E)
    return emb, gate


if __name__ == "__main__":
    # Small shapes consistent with the module (Lq == max_q_len).
    B, Lq, E, H, Ns = 2, 8, 16, 32, 12
    key = jax.random.PRNGKey(0)
    k_q, k_s, k_wq, k_bq, k_wk, k_bk, k_wa, k_ba = jax.random.split(key, 8)

    question = jax.random.normal(k_q, (B, Lq, E), dtype=jnp.float32)
    schema = jax.random.normal(k_s, (1, Ns, E), dtype=jnp.float32)

    # Deterministic parameter init (Linear weights stored as (in, out)).
    params = {
        "wq_w": jax.random.normal(k_wq, (E, H), dtype=jnp.float32) * 0.1,
        "wq_b": jax.random.normal(k_bq, (H,), dtype=jnp.float32) * 0.1,
        "wk_w": jax.random.normal(k_wk, (E, H), dtype=jnp.float32) * 0.1,
        "wk_b": jax.random.normal(k_bk, (H,), dtype=jnp.float32) * 0.1,
        "attn_w": jax.random.normal(k_wa, (Lq,), dtype=jnp.float32) * 0.1,
        "attn_b": jax.random.normal(k_ba, (1,), dtype=jnp.float32) * 0.1,
    }

    emb, gate = sequential_schema_attention(question, schema, params)
    emb, gate = jax.block_until_ready(emb), jax.block_until_ready(gate)

    emb_ref, gate_ref = reference(question, schema, params)
    assert emb.shape == (B, Ns, E) and gate.shape == (B, Ns)
    # Tolerance accounts for the approximate EUP reciprocal in the fused softmax.
    assert jnp.allclose(gate, gate_ref, atol=2e-3, rtol=2e-3)
    assert jnp.allclose(emb, emb_ref, atol=2e-3, rtol=2e-3)

    print("KERNEL_OK")
</pallas_src>

<mosaic_0001>
module attributes {stable_mosaic.version = 11 : i64} {
  func.func @kernel(%arg0: i32, %arg1: memref<2x128xf32, #tpu.memory_space<vmem>>, %arg2: memref<128x96xf32, #tpu.memory_space<vmem>>, %arg3: memref<1x96xf32, #tpu.memory_space<vmem>>, %arg4: memref<8xf32, #tpu.memory_space<smem>>, %arg5: memref<1xf32, #tpu.memory_space<smem>>, %arg6: memref<2x12xf32, #tpu.memory_space<vmem>>) attributes {dimension_semantics = [#tpu.dimension_semantics<parallel>], iteration_bounds = array<i64: 1>, scalar_prefetch = 0 : i64, scratch_operands = 0 : i64, tpu.core_type = #tpu.core_type<tc>, window_params = [{transform_indices = @transform_0, window_bounds = array<i64: 2, 128>}, {pipeline_mode = #tpu.pipeline_mode<synchronous>, transform_indices = @transform_1, window_bounds = array<i64: 128, 96>}, {pipeline_mode = #tpu.pipeline_mode<synchronous>, transform_indices = @transform_2, window_bounds = array<i64: 1, 96>}, {transform_indices = @transform_3, window_bounds = array<i64: 8>}, {transform_indices = @transform_4, window_bounds = array<i64: 1>}, {transform_indices = @transform_5, window_bounds = array<i64: 2, 12>}]} {
    %c0 = arith.constant 0 : index
    %c0_0 = arith.constant 0 : index
    %0 = vector.load %arg1[%c0, %c0_0] : memref<2x128xf32, #tpu.memory_space<vmem>>, vector<2x128xf32>
    %c0_1 = arith.constant 0 : index
    %c0_2 = arith.constant 0 : index
    %1 = vector.load %arg2[%c0_1, %c0_2] : memref<128x96xf32, #tpu.memory_space<vmem>>, vector<128x96xf32>
    %cst = arith.constant dense<0.000000e+00> : vector<2x96xf32>
    %2 = tpu.matmul %0, %1, %cst {dimension_numbers = #tpu.dot_dimension_numbers<[1], [0], [0], [1], [0, 0, 1, 1], [], []>} : vector<2x128xf32>, vector<128x96xf32>, vector<2x96xf32> -> vector<2x96xf32>
    %c0_3 = arith.constant 0 : index
    %c0_4 = arith.constant 0 : index
    %3 = vector.load %arg3[%c0_3, %c0_4] : memref<1x96xf32, #tpu.memory_space<vmem>>, vector<1x96xf32>
    %4 = vector.broadcast %3 : vector<1x96xf32> to vector<2x96xf32>
    %5 = arith.addf %2, %4 : vector<2x96xf32>
    %6 = vector.extract_strided_slice %5 {offsets = [0, 0], sizes = [2, 12], strides = [1, 1]} : vector<2x96xf32> to vector<2x12xf32>
    %7 = vector.extract_strided_slice %5 {offsets = [0, 12], sizes = [2, 12], strides = [1, 1]} : vector<2x96xf32> to vector<2x12xf32>
    %8 = arith.maximumf %6, %7 : vector<2x12xf32>
    %9 = vector.extract_strided_slice %5 {offsets = [0, 24], sizes = [2, 12], strides = [1, 1]} : vector<2x96xf32> to vector<2x12xf32>
    %10 = arith.maximumf %8, %9 : vector<2x12xf32>
    %11 = vector.extract_strided_slice %5 {offsets = [0, 36], sizes = [2, 12], strides = [1, 1]} : vector<2x96xf32> to vector<2x12xf32>
    %12 = arith.maximumf %10, %11 : vector<2x12xf32>
    %13 = vector.extract_strided_slice %5 {offsets = [0, 48], sizes = [2, 12], strides = [1, 1]} : vector<2x96xf32> to vector<2x12xf32>
    %14 = arith.maximumf %12, %13 : vector<2x12xf32>
    %15 = vector.extract_strided_slice %5 {offsets = [0, 60], sizes = [2, 12], strides = [1, 1]} : vector<2x96xf32> to vector<2x12xf32>
    %16 = arith.maximumf %14, %15 : vector<2x12xf32>
    %17 = vector.extract_strided_slice %5 {offsets = [0, 72], sizes = [2, 12], strides = [1, 1]} : vector<2x96xf32> to vector<2x12xf32>
    %18 = arith.maximumf %16, %17 : vector<2x12xf32>
    %19 = vector.extract_strided_slice %5 {offsets = [0, 84], sizes = [2, 12], strides = [1, 1]} : vector<2x96xf32> to vector<2x12xf32>
    %20 = arith.maximumf %18, %19 : vector<2x12xf32>
    %cst_5 = arith.constant 0.000000e+00 : f32
    %21 = vector.broadcast %cst_5 : f32 to vector<2x12xf32>
    %cst_6 = arith.constant 0.000000e+00 : f32
    %22 = vector.broadcast %cst_6 : f32 to vector<2x12xf32>
    %23 = vector.extract_strided_slice %5 {offsets = [0, 0], sizes = [2, 12], strides = [1, 1]} : vector<2x96xf32> to vector<2x12xf32>
    %24 = arith.subf %23, %20 : vector<2x12xf32>
    %25 = math.exp %24 : vector<2x12xf32>
    %26 = arith.addf %21, %25 : vector<2x12xf32>
    %c0_7 = arith.constant 0 : index
    %27 = memref.load %arg4[%c0_7] : memref<8xf32, #tpu.memory_space<smem>>
    %28 = vector.broadcast %27 : f32 to vector<2x12xf32>
    %29 = arith.mulf %28, %25 : vector<2x12xf32>
    %30 = arith.addf %22, %29 : vector<2x12xf32>
    %31 = vector.extract_strided_slice %5 {offsets = [0, 12], sizes = [2, 12], strides = [1, 1]} : vector<2x96xf32> to vector<2x12xf32>
    %32 = arith.subf %31, %20 : vector<2x12xf32>
    %33 = math.exp %32 : vector<2x12xf32>
    %34 = arith.addf %26, %33 : vector<2x12xf32>
    %c1 = arith.constant 1 : index
    %35 = memref.load %arg4[%c1] : memref<8xf32, #tpu.memory_space<smem>>
    %36 = vector.broadcast %35 : f32 to vector<2x12xf32>
    %37 = arith.mulf %36, %33 : vector<2x12xf32>
    %38 = arith.addf %30, %37 : vector<2x12xf32>
    %39 = vector.extract_strided_slice %5 {offsets = [0, 24], sizes = [2, 12], strides = [1, 1]} : vector<2x96xf32> to vector<2x12xf32>
    %40 = arith.subf %39, %20 : vector<2x12xf32>
    %41 = math.exp %40 : vector<2x12xf32>
    %42 = arith.addf %34, %41 : vector<2x12xf32>
    %c2 = arith.constant 2 : index
    %43 = memref.load %arg4[%c2] : memref<8xf32, #tpu.memory_space<smem>>
    %44 = vector.broadcast %43 : f32 to vector<2x12xf32>
    %45 = arith.mulf %44, %41 : vector<2x12xf32>
    %46 = arith.addf %38, %45 : vector<2x12xf32>
    %47 = vector.extract_strided_slice %5 {offsets = [0, 36], sizes = [2, 12], strides = [1, 1]} : vector<2x96xf32> to vector<2x12xf32>
    %48 = arith.subf %47, %20 : vector<2x12xf32>
    %49 = math.exp %48 : vector<2x12xf32>
    %50 = arith.addf %42, %49 : vector<2x12xf32>
    %c3 = arith.constant 3 : index
    %51 = memref.load %arg4[%c3] : memref<8xf32, #tpu.memory_space<smem>>
    %52 = vector.broadcast %51 : f32 to vector<2x12xf32>
    %53 = arith.mulf %52, %49 : vector<2x12xf32>
    %54 = arith.addf %46, %53 : vector<2x12xf32>
    %55 = vector.extract_strided_slice %5 {offsets = [0, 48], sizes = [2, 12], strides = [1, 1]} : vector<2x96xf32> to vector<2x12xf32>
    %56 = arith.subf %55, %20 : vector<2x12xf32>
    %57 = math.exp %56 : vector<2x12xf32>
    %58 = arith.addf %50, %57 : vector<2x12xf32>
    %c4 = arith.constant 4 : index
    %59 = memref.load %arg4[%c4] : memref<8xf32, #tpu.memory_space<smem>>
    %60 = vector.broadcast %59 : f32 to vector<2x12xf32>
    %61 = arith.mulf %60, %57 : vector<2x12xf32>
    %62 = arith.addf %54, %61 : vector<2x12xf32>
    %63 = vector.extract_strided_slice %5 {offsets = [0, 60], sizes = [2, 12], strides = [1, 1]} : vector<2x96xf32> to vector<2x12xf32>
    %64 = arith.subf %63, %20 : vector<2x12xf32>
    %65 = math.exp %64 : vector<2x12xf32>
    %66 = arith.addf %58, %65 : vector<2x12xf32>
    %c5 = arith.constant 5 : index
    %67 = memref.load %arg4[%c5] : memref<8xf32, #tpu.memory_space<smem>>
    %68 = vector.broadcast %67 : f32 to vector<2x12xf32>
    %69 = arith.mulf %68, %65 : vector<2x12xf32>
    %70 = arith.addf %62, %69 : vector<2x12xf32>
    %71 = vector.extract_strided_slice %5 {offsets = [0, 72], sizes = [2, 12], strides = [1, 1]} : vector<2x96xf32> to vector<2x12xf32>
    %72 = arith.subf %71, %20 : vector<2x12xf32>
    %73 = math.exp %72 : vector<2x12xf32>
    %74 = arith.addf %66, %73 : vector<2x12xf32>
    %c6 = arith.constant 6 : index
    %75 = memref.load %arg4[%c6] : memref<8xf32, #tpu.memory_space<smem>>
    %76 = vector.broadcast %75 : f32 to vector<2x12xf32>
    %77 = arith.mulf %76, %73 : vector<2x12xf32>
    %78 = arith.addf %70, %77 : vector<2x12xf32>
    %79 = vector.extract_strided_slice %5 {offsets = [0, 84], sizes = [2, 12], strides = [1, 1]} : vector<2x96xf32> to vector<2x12xf32>
    %80 = arith.subf %79, %20 : vector<2x12xf32>
    %81 = math.exp %80 : vector<2x12xf32>
    %82 = arith.addf %74, %81 : vector<2x12xf32>
    %c7 = arith.constant 7 : index
    %83 = memref.load %arg4[%c7] : memref<8xf32, #tpu.memory_space<smem>>
    %84 = vector.broadcast %83 : f32 to vector<2x12xf32>
    %85 = arith.mulf %84, %81 : vector<2x12xf32>
    %86 = arith.addf %78, %85 : vector<2x12xf32>
    %87 = tpu.reciprocal %82 {approx = true} : vector<2x12xf32> -> vector<2x12xf32>
    %88 = arith.mulf %86, %87 : vector<2x12xf32>
    %c0_8 = arith.constant 0 : index
    %89 = memref.load %arg5[%c0_8] : memref<1xf32, #tpu.memory_space<smem>>
    %90 = vector.broadcast %89 : f32 to vector<2x12xf32>
    %91 = arith.addf %88, %90 : vector<2x12xf32>
    %92 = arith.negf %91 : vector<2x12xf32>
    %93 = math.exp %92 : vector<2x12xf32>
    %cst_9 = arith.constant 1.000000e+00 : f32
    %94 = vector.broadcast %cst_9 : f32 to vector<2x12xf32>
    %95 = arith.addf %94, %93 : vector<2x12xf32>
    %96 = arith.divf %94, %95 : vector<2x12xf32>
    %c0_10 = arith.constant 0 : index
    %c0_11 = arith.constant 0 : index
    %97 = vector.load %arg6[%c0_10, %c0_11] : memref<2x12xf32, #tpu.memory_space<vmem>>, vector<2x12xf32>
    tpu.vector_store %arg6[%c0_10, %c0_11], %96 {strides = array<i32>} : memref<2x12xf32, #tpu.memory_space<vmem>>, vector<2x12xf32>,
    return
  }
  func.func @transform_0(%arg0: i32) -> (i32, i32) {
    %c0_i32 = arith.constant 0 : i32
    %c0_i32_0 = arith.constant 0 : i32
    return %arg0, %c0_i32 : i32, i32
  }
  func.func @transform_1(%arg0: i32) -> (i32, i32) {
    %c0_i32 = arith.constant 0 : i32
    %c0_i32_0 = arith.constant 0 : i32
    %c0_i32_1 = arith.constant 0 : i32
    return %c0_i32, %c0_i32_0 : i32, i32
  }
  func.func @transform_2(%arg0: i32) -> (i32, i32) {
    %c0_i32 = arith.constant 0 : i32
    %c0_i32_0 = arith.constant 0 : i32
    %c0_i32_1 = arith.constant 0 : i32
    return %c0_i32, %c0_i32_0 : i32, i32
  }
  func.func @transform_3(%arg0: i32) -> i32 {
    %c0_i32 = arith.constant 0 : i32
    %c0_i32_0 = arith.constant 0 : i32
    return %c0_i32 : i32
  }
  func.func @transform_4(%arg0: i32) -> i32 {
    %c0_i32 = arith.constant 0 : i32
    %c0_i32_0 = arith.constant 0 : i32
    return %c0_i32 : i32
  }
  func.func @transform_5(%arg0: i32) -> (i32, i32) {
    %c0_i32 = arith.constant 0 : i32
    %c0_i32_0 = arith.constant 0 : i32
    return %arg0, %c0_i32 : i32, i32
  }
}

</mosaic_0001>

<llo_original>
// kernel: tpu_custom_call.1
$region0: #{tpu_custom_call.1}
  #allocation0 [shape = 'u32[]', space=smem, size = 0x4, offset = 0x4, fixed_abs, tag = 'smem constant byte address 0x4 - core index']
  #allocation1 [shape = 'u32[72,128]{1,0:T(1,128)}', space=vmem, size = 0x9000, scoped, tag = 'internal scratch']
  #allocation2 [shape = 'f32[1]{0:T(128)S(6)}', space=smem, size = 0x200, scoped, tag = 'scoped memory for tpu_custom_call.1']
  %s0 = inlined_call_operand.vmem [shape: f32[2,128], index: 0, kind: input, shape index: {}]
  %s1 = inlined_call_operand.vmem [shape: f32[128,96], index: 1, kind: input, shape index: {}]
  %s2 = inlined_call_operand.vmem [shape: f32[1,96], index: 2, kind: input, shape index: {}]
  %s3 = inlined_call_operand.vmem [shape: f32[8], index: 3, kind: input, shape index: {}]
  %s4 = inlined_call_operand.<no memory space> [shape: f32[1], index: 4, kind: input, shape index: {}]
  %s5 = inlined_call_operand.hbm [shape: f32[2,12], index: 5, kind: output, shape index: {}]
  %s6 = sld [smem:[#allocation0]]
  $region34: #{tpu_custom_call.1} parent=0
    _
  %s8 = ssub.s32 1, %s6
  %s9 = scalar_select 0, %s8, %s6
  %10 = sst [smem:[#allocation2]] %s4
  $region1: #{tpu_custom_call.1} parent=0
    #allocation3 [shape = 'u8[512]{0}', space=smem, size = 0x200, scoped, tag = 'input window, operand 3, single buffered']
    #allocation4 [shape = 's32[1]{0}', space=sflag, size = 0x4, scoped, tag = 'scoped memory for tpu_custom_call.1']
    #allocation5 [shape = 's32[1]{0}', space=sflag, size = 0x4, scoped, tag = 'scoped memory for tpu_custom_call.1']
    #allocation6 [shape = 'u8[1024]{0}', space=vmem, size = 0x400, scoped, tag = 'output window, operand 0, single buffered']
    %11 = vsyncpa [#allocation5], 0
    %12 = vsyncpa [#allocation4], 0
    // Predicated region
    $region2: #{tpu_custom_call.1} parent=1 // pred_check
      _
    $region3: #{tpu_custom_call.1} parent=1 // pred_check_branch
      %14 = sbr.rel (0) target = $region5
    $region4: #{tpu_custom_call.1} parent=1 // pred_region
      _
    $region5: #{tpu_custom_call.1} parent=1 // pred_fallthru
      _
    // Predicated region
    $region6: #{tpu_custom_call.1} parent=1 // pred_check
      _
    $region7: #{tpu_custom_call.1} parent=1 // pred_check_branch
      %16 = sbr.rel (0) target = $region9
    $region8: #{tpu_custom_call.1} parent=1 // pred_region
      _
    $region9: #{tpu_custom_call.1} parent=1 // pred_fallthru
      _
    // Predicated region
    $region10: #{tpu_custom_call.1} parent=1 // pred_check
      _
    $region11: #{tpu_custom_call.1} parent=1 // pred_check_branch
      %18 = sbr.rel (0) target = $region13
    $region12: #{tpu_custom_call.1} parent=1 // pred_region
      _
    $region13: #{tpu_custom_call.1} parent=1 // pred_fallthru
      _
    // Predicated region
    $region14: #{tpu_custom_call.1} parent=1 // pred_check
      _
    $region15: #{tpu_custom_call.1} parent=1 // pred_check_branch
      %20 = sbr.rel (0) target = $region17
    $region16: #{tpu_custom_call.1} parent=1 // pred_region
      %22 = vsyncadd [#allocation5], 0
      %s24 = sshll.u32 %s3, 4
      %s25 = int_to_ptr.vmem [resolvable:$true] %s24
      %27 = dma.vmem_to_smem %s25, 16, [#allocation3], [#allocation5]
    $region17: #{tpu_custom_call.1} parent=1 // pred_fallthru
      _
    // Predicated region
    $region18: #{tpu_custom_call.1} parent=1 // pred_check
      _
    $region19: #{tpu_custom_call.1} parent=1 // pred_check_branch
      %29 = sbr.rel (0) target = $region21
    $region20: #{tpu_custom_call.1} parent=1 // pred_region
      _
    $region21: #{tpu_custom_call.1} parent=1 // pred_fallthru
      _
    // Predicated region
    $region22: #{tpu_custom_call.1} parent=1 // pred_check
      _
    $region23: #{tpu_custom_call.1} parent=1 // pred_check_branch
      %31 = sbr.rel (0) target = $region25
    $region24: #{tpu_custom_call.1} parent=1 // pred_region
      %33 = dma.done [#allocation5], 16
    $region25: #{tpu_custom_call.1} parent=1 // pred_fallthru
      _
    %34 = sfence
    %v35 = vld [vmem:[%s0] sm:$0x3]
    %v36 = vld [vmem:[%s1] sm:$0xff]
    %v37 = vld [vmem:[%s1 + $0x8] sm:$0xff]
    %v38 = vld [vmem:[%s1 + $0x10] sm:$0xff]
    %v39 = vld [vmem:[%s1 + $0x18] sm:$0xff]
    %v40 = vld [vmem:[%s1 + $0x20] sm:$0xff]
    %v41 = vld [vmem:[%s1 + $0x28] sm:$0xff]
    %v42 = vld [vmem:[%s1 + $0x30] sm:$0xff]
    %v43 = vld [vmem:[%s1 + $0x38] sm:$0xff]
    %v44 = vld [vmem:[%s1 + $0x40] sm:$0xff]
    %v45 = vld [vmem:[%s1 + $0x48] sm:$0xff]
    %v46 = vld [vmem:[%s1 + $0x50] sm:$0xff]
    %v47 = vld [vmem:[%s1 + $0x58] sm:$0xff]
    %v48 = vld [vmem:[%s1 + $0x60] sm:$0xff]
    %v49 = vld [vmem:[%s1 + $0x68] sm:$0xff]
    %v50 = vld [vmem:[%s1 + $0x70] sm:$0xff]
    %v51 = vld [vmem:[%s1 + $0x78] sm:$0xff]
    %v52 = vld [vmem:[%s2] sm:$0x1]
    %v54 = vperm.slane %v52, 0
    %56 = vmatpush.msra.mxu0 %v51
    %57 = vmatpush.msra.mxu0 %v50
    %58 = vmatpush.msra.mxu0 %v49
    %59 = vmatpush.msra.mxu0 %v48
    %60 = vmatpush.msra.mxu0 %v47
    %61 = vmatpush.msra.mxu0 %v46
    %62 = vmatpush.msra.mxu0 %v45
    %63 = vmatpush.msra.mxu0 %v44
    %64 = vmatpush.msra.mxu0 %v43
    %65 = vmatpush.msra.mxu0 %v42
    %66 = vmatpush.msra.mxu0 %v41
    %67 = vmatpush.msra.mxu0 %v40
    %68 = vmatpush.msra.mxu0 %v39
    %69 = vmatpush.msra.mxu0 %v38
    %70 = vmatpush.msra.mxu0 %v37
    %71 = vmatpush.msra.mxu0 %v36
    %72 = vmatmul.f32.gmra.mxu0 %v35
    %v73 = vpop.f32.mrf.mxu0
    %v74 = vadd.f32 %v54, %v73
    %75 = vdwg.mxu0
    %77 = vrot.lane.b32.xlu0 %v74, 116
    %v78 = vpop.permute.xlu0 %77
    %v80 = vmax.f32 %v74, %v78
    %81 = vrot.lane.b32.xlu0 %v74, 104
    %v82 = vpop.permute.xlu0 %81
    %v84 = vmax.f32 %v80, %v82
    %85 = vrot.lane.b32.xlu0 %v74, 92
    %v86 = vpop.permute.xlu0 %85
    %v88 = vmax.f32 %v84, %v86
    %89 = vrot.lane.b32.xlu0 %v74, 80
    %v90 = vpop.permute.xlu0 %89
    %v92 = vmax.f32 %v88, %v90
    %93 = vrot.lane.b32.xlu0 %v74, 68
    %v94 = vpop.permute.xlu0 %93
    %v96 = vmax.f32 %v92, %v94
    %97 = vrot.lane.b32.xlu0 %v74, 56
    %v98 = vpop.permute.xlu0 %97
    %v100 = vmax.f32 %v96, %v98
    %101 = vrot.lane.b32.xlu0 %v74, 44
    %v102 = vpop.permute.xlu0 %101
    %v104 = vmax.f32 %v100, %v102
    %v105 = vsub.f32 %v74, %v104
    %v106 = vmul.f32 %v105, 1.442695
    %v107 = vpow.pop %v106
    %v108 = vadd.f32 %v107, 0.0
    %s109 = sld [smem:[#allocation3]]
    %v110 = vstv %s109
    %v111 = vmul.f32 %v110, %v107
    %v112 = vadd.f32 %v111, 0.0
    %114 = vrot.lane.b32.xlu0 %v104, 12
    %v115 = vpop.permute.xlu0 %114
    %v117 = vsub.f32 %v74, %v115
    %v118 = vmul.f32 %v117, 1.442695
    %v119 = vpow.pop %v118
    %121 = vrot.lane.b32.xlu0 %v119, 116
    %v122 = vpop.permute.xlu0 %121
    %v124 = vadd.f32 %v108, %v122
    %s125 = sld [smem:[#allocation3 + $0x1]]
    %v126 = vstv %s125
    %v127 = vmul.f32 %v126, %v119
    %129 = vrot.lane.b32.xlu0 %v127, 116
    %v130 = vpop.permute.xlu0 %129
    %v132 = vadd.f32 %v112, %v130
    %133 = vrot.lane.b32.xlu0 %v104, 24
    %v134 = vpop.permute.xlu0 %133
    %v136 = vsub.f32 %v74, %v134
    %v137 = vmul.f32 %v136, 1.442695
    %v138 = vpow.pop %v137
    %140 = vrot.lane.b32.xlu0 %v138, 104
    %v141 = vpop.permute.xlu0 %140
    %v143 = vadd.f32 %v124, %v141
    %s144 = sld [smem:[#allocation3 + $0x2]]
    %v145 = vstv %s144
    %v146 = vmul.f32 %v145, %v138
    %148 = vrot.lane.b32.xlu0 %v146, 104
    %v149 = vpop.permute.xlu0 %148
    %v151 = vadd.f32 %v132, %v149
    %152 = vrot.lane.b32.xlu0 %v104, 36
    %v153 = vpop.permute.xlu0 %152
    %v155 = vsub.f32 %v74, %v153
    %v156 = vmul.f32 %v155, 1.442695
    %v157 = vpow.pop %v156
    %159 = vrot.lane.b32.xlu0 %v157, 92
    %v160 = vpop.permute.xlu0 %159
    %v162 = vadd.f32 %v143, %v160
    %s163 = sld [smem:[#allocation3 + $0x3]]
    %v164 = vstv %s163
    %v165 = vmul.f32 %v164, %v157
    %167 = vrot.lane.b32.xlu0 %v165, 92
    %v168 = vpop.permute.xlu0 %167
    %v170 = vadd.f32 %v151, %v168
    %171 = vrot.lane.b32.xlu0 %v104, 48
    %v172 = vpop.permute.xlu0 %171
    %v174 = vsub.f32 %v74, %v172
    %v175 = vmul.f32 %v174, 1.442695
    %v176 = vpow.pop %v175
    %178 = vrot.lane.b32.xlu0 %v176, 80
    %v179 = vpop.permute.xlu0 %178
    %v181 = vadd.f32 %v162, %v179
    %s182 = sld [smem:[#allocation3 + $0x4]]
    %v183 = vstv %s182
    %v184 = vmul.f32 %v183, %v176
    %186 = vrot.lane.b32.xlu0 %v184, 80
    %v187 = vpop.permute.xlu0 %186
    %v189 = vadd.f32 %v170, %v187
    %190 = vrot.lane.b32.xlu0 %v104, 60
    %v191 = vpop.permute.xlu0 %190
    %v193 = vsub.f32 %v74, %v191
    %v194 = vmul.f32 %v193, 1.442695
    %v195 = vpow.pop %v194
    %197 = vrot.lane.b32.xlu0 %v195, 68
    %v198 = vpop.permute.xlu0 %197
    %v200 = vadd.f32 %v181, %v198
    %s201 = sld [smem:[#allocation3 + $0x5]]
    %v202 = vstv %s201
    %v203 = vmul.f32 %v202, %v195
    %205 = vrot.lane.b32.xlu0 %v203, 68
    %v206 = vpop.permute.xlu0 %205
    %v208 = vadd.f32 %v189, %v206
    %209 = vrot.lane.b32.xlu0 %v104, 72
    %v210 = vpop.permute.xlu0 %209
    %v212 = vsub.f32 %v74, %v210
    %v213 = vmul.f32 %v212, 1.442695
    %v214 = vpow.pop %v213
    %216 = vrot.lane.b32.xlu0 %v214, 56
    %v217 = vpop.permute.xlu0 %216
    %v219 = vadd.f32 %v200, %v217
    %s220 = sld [smem:[#allocation3 + $0x6]]
    %v221 = vstv %s220
    %v222 = vmul.f32 %v221, %v214
    %224 = vrot.lane.b32.xlu0 %v222, 56
    %v225 = vpop.permute.xlu0 %224
    %v227 = vadd.f32 %v208, %v225
    %228 = vrot.lane.b32.xlu0 %v104, 84
    %v229 = vpop.permute.xlu0 %228
    %v231 = vsub.f32 %v74, %v229
    %v232 = vmul.f32 %v231, 1.442695
    %v233 = vpow.pop %v232
    %235 = vrot.lane.b32.xlu0 %v233, 44
    %v236 = vpop.permute.xlu0 %235
    %v238 = vadd.f32 %v219, %v236
    %s239 = sld [smem:[#allocation3 + $0x7]]
    %v240 = vstv %s239
    %v241 = vmul.f32 %v240, %v233
    %243 = vrot.lane.b32.xlu0 %v241, 44
    %v244 = vpop.permute.xlu0 %243
    %v246 = vadd.f32 %v227, %v244
    %v247 = vrcp.pop %v238
    %v248 = vmul.f32 %v246, %v247
    %s249 = sld [smem:[#allocation2]]
    %v250 = vstv %s249
    %v251 = vadd.f32 %v248, %v250
    %v252 = vxor.u32 %v251, 2147483648
    %v253 = vmul.f32 %v252, 1.442695
    %v254 = vpow.pop %v253
    %v255 = vadd.f32 %v254, 1.0
    %v256 = vrcp.pop %v255
    %v257 = vmul.f32 %v255, %v256
    %v258 = vsub.f32 1.0, %v257
    %v259 = vmul.f32 %v256, %v258
    %v260 = vadd.f32 %v256, %v259
    %vm261 = vweird.f32 %v255
    %vm262 = vweird.f32 %v256
    %vm263 = vmor %vm261, %vm262
    %v264 = vsel %vm263, %v256, %v260
    %v265 = vand.u32 2147483647, %v255
    %vm266 = vcmp.eq.f32.partialorder %v265, 8.507059e+37
    %v267 = vand.u32 %v255, 2147483648
    %v268 = vor.u32 1.1754944e-38, %v267
    %v269 = vsel %vm266, %v268, %v264
    %v270 = vmul.f32 1.0, %v269
    %vm271 = vcmask 91136
    %272 = vst.msk [vmem:[#allocation6] sm:$0x3] %vm271, %v270
    // Predicated region
    $region26: #{tpu_custom_call.1} parent=1 // pred_check
      _
    $region27: #{tpu_custom_call.1} parent=1 // pred_check_branch
      %274 = sbr.rel (0) target = $region29
    $region28: #{tpu_custom_call.1} parent=1 // pred_region
      %276 = vsyncadd [#allocation4], 0
      %s278 = sshll.u32 [#allocation6], 4
      %s279 = int_to_ptr.vmem [resolvable:$true] %s278
      %s280 = sshll.u32 %s5, 4
      %s281 = int_to_ptr.hbm [resolvable:$true] %s280
      %283 = dma.vmem_to_hbm [thread:$0]  %s279, 32, %s281, [#allocation4]
    $region29: #{tpu_custom_call.1} parent=1 // pred_fallthru
      _
    // Predicated region
    $region30: #{tpu_custom_call.1} parent=1 // pred_check
      _
    $region31: #{tpu_custom_call.1} parent=1 // pred_check_branch
      %285 = sbr.rel (0) target = $region33
    $region32: #{tpu_custom_call.1} parent=1 // pred_region
      %287 = dma.done [#allocation4], 32
    $region33: #{tpu_custom_call.1} parent=1 // pred_fallthru
      _
    %288 = vsyncpa [#allocation4], 1
    %289 = vsyncpa [#allocation5], 1

</llo_original>
